<compile_context>
chip_gen: v5e
topology: v5e:2x2
jax: 0.10.0
libtpu: 0.0.40
codegen_flags: <defaults>
</compile_context>

<pallas_src>
import functools

import jax
import jax.numpy as jnp
from jax.experimental import pallas as pl
from jax.experimental.pallas import tpu as pltpu


def _nrf_kernel(x_ref, w1_ref, b1_ref, w2_ref, scal_ref, out_ref):
    # x_ref:    (TR, D*P)  f32   P original rows packed per row
    # w1_ref:   (D*P, H*P) bf16  block-diagonal W1^T (P copies of [D,H])
    # b1_ref:   (1, H*P)   f32   layer1 bias tiled P times
    # w2_ref:   (H*P, P)   bf16  block-structured W2^T (column j = slot j)
    # scal_ref: SMEM (3,)  f32   [b2, output_mod.weight, output_mod.bias]
    # out_ref:  (TR, P)    f32
    x = x_ref[...].astype(jnp.bfloat16)

    # layer1 + sigmoid  (bf16 MXU matmul K=N=256, f32 accumulate, EUP exp)
    z1 = jnp.dot(x, w1_ref[...], preferred_element_type=jnp.float32) + b1_ref[...]
    h1 = jax.nn.sigmoid(z1)

    # layer2 + sigmoid  (bf16 MXU matmul K=256, N=P)
    z2 = jnp.dot(h1.astype(jnp.bfloat16), w2_ref[...],
                 preferred_element_type=jnp.float32) + scal_ref[0]
    s2 = jax.nn.sigmoid(z2)

    # output_mod: 1->1 linear is scale + shift (scalars from SMEM)
    out_ref[...] = (s2 * scal_ref[1] + scal_ref[2]).astype(out_ref.dtype)


def pack_params(p, *, pack=8):
    """One-time packing (outside the per-call jit): block-diagonal bf16 weights."""
    D, H = p["w1_t"].shape
    P = pack
    eye_p = jnp.eye(P, dtype=jnp.float32)
    w1_pk = jnp.kron(eye_p, p["w1_t"].astype(jnp.float32)).astype(jnp.bfloat16)
    b1_pk = jnp.tile(p["b1"].reshape(1, H).astype(jnp.float32), (1, P))
    w2_pk = jnp.kron(eye_p, p["w2_t"].reshape(H, 1).astype(jnp.float32)
                     ).astype(jnp.bfloat16)
    scal = jnp.stack([
        p["b2"].reshape(()).astype(jnp.float32),
        p["wo"].reshape(()).astype(jnp.float32),
        p["bo"].reshape(()).astype(jnp.float32),
    ])
    return {"w1_pk": w1_pk, "b1_pk": b1_pk, "w2_pk": w2_pk, "scal": scal}


@functools.partial(jax.jit, static_argnames=("pack", "tile_rows"))
def nrf_forward(x, w1_pk, b1_pk, w2_pk, scal, *, pack=8, tile_rows=4096):
    """x: [B, D] f32 (or bf16). Weights come pre-packed from pack_params()."""
    B, D = x.shape
    P = pack
    DP, HP = w1_pk.shape
    assert DP == D * P, "packed W1 does not match input feature dim / pack factor"

    # --- pad batch to a multiple of the pack factor (no assert cliff) -------
    B_pad = pl.cdiv(B, P) * P
    if B_pad != B:
        x = jnp.pad(x, ((0, B_pad - B), (0, 0)))
    Bp = B_pad // P

    # --- pick tile: large, multiple of 8, and >=2 grid steps when possible --
    tr = min(tile_rows, Bp)
    if Bp > 8:
        half = (Bp // 2) // 8 * 8          # guarantees >=2 steps for megacore
        if half >= 8:
            tr = min(tr, half)
    tr = max(8, (tr // 8) * 8)

    # --- pad the packed batch to a multiple of the tile (keep tr large) -----
    n_tiles = pl.cdiv(Bp, tr)
    Bp_pad = n_tiles * tr
    x_pk = x.reshape(Bp, D * P)            # free, row-major packing
    if Bp_pad != Bp:
        x_pk = jnp.pad(x_pk, ((0, Bp_pad - Bp), (0, 0)))

    # constant-index weights: single-buffered (saves VMEM, fetched once)
    w_pipe = pl.Buffered(1) if hasattr(pl, "Buffered") else None

    out_pk = pl.pallas_call(
        _nrf_kernel,
        out_shape=jax.ShapeDtypeStruct((Bp_pad, P), jnp.float32),
        grid_spec=pltpu.PrefetchScalarGridSpec(
            num_scalar_prefetch=0,
            grid=(n_tiles,),
            in_specs=[
                pl.BlockSpec((tr, D * P), lambda i: (i, 0)),     # packed x tile
                pl.BlockSpec((DP, HP), lambda i: (0, 0),
                             pipeline_mode=w_pipe),              # block-diag W1^T
                pl.BlockSpec((1, HP), lambda i: (0, 0),
                             pipeline_mode=w_pipe),              # tiled b1
                pl.BlockSpec((HP, P), lambda i: (0, 0),
                             pipeline_mode=w_pipe),              # block W2^T
                pl.BlockSpec(memory_space=pltpu.MemorySpace.SMEM),  # [b2, wo, bo]
            ],
            out_specs=pl.BlockSpec((tr, P), lambda i: (i, 0)),   # lane-dense out
        ),
        compiler_params=pltpu.CompilerParams(
            dimension_semantics=("parallel",),   # batch axis -> both v7x TCs
            vmem_limit_bytes=48 * 1024 * 1024,   # safe on v5e/v6e/v7x
        ),
    )(x_pk, w1_pk, b1_pk, w2_pk, scal)

    return out_pk[:Bp].reshape(B_pad, 1)[:B]


def init_params(key, input_size, h1_size, weight_scaling):
    """Deterministic init mimicking nn.Linear default (U(-1/sqrt(fan_in), +)),
    then applying the in-place weight scalings from nrfmodel.__init__."""
    ks = jax.random.split(key, 6)

    def lin_init(kw, kb, fan_in, fan_out):
        bound = 1.0 / jnp.sqrt(jnp.float32(fan_in))
        w = jax.random.uniform(kw, (fan_out, fan_in), jnp.float32, -bound, bound)
        b = jax.random.uniform(kb, (fan_out,), jnp.float32, -bound, bound)
        return w, b

    w1, b1 = lin_init(ks[0], ks[1], input_size, h1_size)
    w2, b2 = lin_init(ks[2], ks[3], h1_size, 1)
    wo, bo = lin_init(ks[4], ks[5], 1, 1)

    w1 = w1 * weight_scaling           # layer1.weight.mul_(weight_scaling)
    w2 = w2 * (weight_scaling * 10.0)  # layer2.weight.mul_(weight_scaling * 10)

    return {
        "w1_t": w1.T,                      # (D, H)
        "b1": b1.reshape(1, h1_size),      # (1, H)
        "w2_t": w2.T,                      # (H, 1)
        "b2": b2.reshape(1, 1),            # (1, 1)
        "wo": wo.reshape(1, 1),            # (1, 1)
        "bo": bo.reshape(1, 1),            # (1, 1)
    }


def nrf_reference(x, p):
    """Pure-JAX f32 reference of the PyTorch forward."""
    h1 = jax.nn.sigmoid(x @ p["w1_t"] + p["b1"])
    s2 = jax.nn.sigmoid(h1 @ p["w2_t"] + p["b2"])
    return s2 * p["wo"][0, 0] + p["bo"][0, 0]


# TODO(synk): nn.Dropout path (use_dropout=True) not implemented; the module is
# run with use_dropout=False / eval semantics, matching the original default.

if __name__ == "__main__":
    INPUT_SIZE = 32       # input feature dim
    H1_SIZE = 32          # hidden dim
    BATCH = 250           # deliberately not a multiple of 8: exercises padding
    WEIGHT_SCALING = 0.5
    PACK = 8

    key = jax.random.PRNGKey(0)
    k_x, k_p = jax.random.split(key)

    x = jax.random.normal(k_x, (BATCH, INPUT_SIZE), jnp.float32)
    params = init_params(k_p, INPUT_SIZE, H1_SIZE, WEIGHT_SCALING)
    packed = pack_params(params, pack=PACK)   # one-time, outside the jitted call

    # tile_rows=16 -> 2 grid steps at this tiny batch (exercises pipelining and
    # both v7x TensorCores); at real batch sizes the default 4096 is used.
    out = nrf_forward(x, packed["w1_pk"], packed["b1_pk"], packed["w2_pk"],
                      packed["scal"], pack=PACK, tile_rows=16)
    out = jax.block_until_ready(out)

    ref = nrf_reference(x, params)
    assert out.shape == (BATCH, 1)
    # bf16 MXU path: validate against the f32 reference with a relaxed tolerance.
    assert jnp.allclose(out, ref, atol=3e-2, rtol=3e-2), (
        "max abs err", float(jnp.max(jnp.abs(out - ref))))

    print("KERNEL_OK")
</pallas_src>

<mosaic_0001>
module attributes {stable_mosaic.version = 11 : i64} {
  func.func @_nrf_kernel(%arg0: i32, %arg1: memref<16x256xf32, #tpu.memory_space<vmem>>, %arg2: memref<256x256xbf16, #tpu.memory_space<vmem>>, %arg3: memref<1x256xf32, #tpu.memory_space<vmem>>, %arg4: memref<256x8xbf16, #tpu.memory_space<vmem>>, %arg5: memref<3xf32, #tpu.memory_space<smem>>, %arg6: memref<16x8xf32, #tpu.memory_space<vmem>>) attributes {dimension_semantics = [#tpu.dimension_semantics<parallel>], iteration_bounds = array<i64: 2>, scalar_prefetch = 0 : i64, scratch_operands = 0 : i64, tpu.core_type = #tpu.core_type<tc>, window_params = [{transform_indices = @transform_0, window_bounds = array<i64: 16, 256>}, {pipeline_mode = #tpu.pipeline_mode<synchronous>, transform_indices = @transform_1, window_bounds = array<i64: 256, 256>}, {pipeline_mode = #tpu.pipeline_mode<synchronous>, transform_indices = @transform_2, window_bounds = array<i64: 1, 256>}, {pipeline_mode = #tpu.pipeline_mode<synchronous>, transform_indices = @transform_3, window_bounds = array<i64: 256, 8>}, {transform_indices = @transform_4, window_bounds = array<i64: 3>}, {transform_indices = @transform_5, window_bounds = array<i64: 16, 8>}]} {
    %c0 = arith.constant 0 : index
    %c0_0 = arith.constant 0 : index
    %0 = vector.load %arg1[%c0, %c0_0] : memref<16x256xf32, #tpu.memory_space<vmem>>, vector<16x256xf32>
    %1 = arith.truncf %0 : vector<16x256xf32> to vector<16x256xbf16>
    %c0_1 = arith.constant 0 : index
    %c0_2 = arith.constant 0 : index
    %2 = vector.load %arg2[%c0_1, %c0_2] : memref<256x256xbf16, #tpu.memory_space<vmem>>, vector<256x256xbf16>
    %cst = arith.constant dense<0.000000e+00> : vector<16x256xf32>
    %3 = tpu.matmul %1, %2, %cst {dimension_numbers = #tpu.dot_dimension_numbers<[1], [0], [0], [1], [0, 0, 1, 1], [], []>} : vector<16x256xbf16>, vector<256x256xbf16>, vector<16x256xf32> -> vector<16x256xf32>
    %c0_3 = arith.constant 0 : index
    %c0_4 = arith.constant 0 : index
    %4 = vector.load %arg3[%c0_3, %c0_4] : memref<1x256xf32, #tpu.memory_space<vmem>>, vector<1x256xf32>
    %5 = vector.broadcast %4 : vector<1x256xf32> to vector<16x256xf32>
    %6 = arith.addf %3, %5 : vector<16x256xf32>
    %7 = arith.negf %6 : vector<16x256xf32>
    %8 = math.exp %7 : vector<16x256xf32>
    %cst_5 = arith.constant 1.000000e+00 : f32
    %9 = vector.broadcast %cst_5 : f32 to vector<16x256xf32>
    %10 = arith.addf %9, %8 : vector<16x256xf32>
    %11 = arith.divf %9, %10 : vector<16x256xf32>
    %12 = arith.truncf %11 : vector<16x256xf32> to vector<16x256xbf16>
    %c0_6 = arith.constant 0 : index
    %c0_7 = arith.constant 0 : index
    %13 = vector.load %arg4[%c0_6, %c0_7] : memref<256x8xbf16, #tpu.memory_space<vmem>>, vector<256x8xbf16>
    %cst_8 = arith.constant dense<0.000000e+00> : vector<16x8xf32>
    %14 = tpu.matmul %12, %13, %cst_8 {dimension_numbers = #tpu.dot_dimension_numbers<[1], [0], [0], [1], [0, 0, 1, 1], [], []>} : vector<16x256xbf16>, vector<256x8xbf16>, vector<16x8xf32> -> vector<16x8xf32>
    %c0_9 = arith.constant 0 : index
    %15 = memref.load %arg5[%c0_9] : memref<3xf32, #tpu.memory_space<smem>>
    %16 = vector.broadcast %15 : f32 to vector<16x8xf32>
    %17 = arith.addf %14, %16 : vector<16x8xf32>
    %18 = arith.negf %17 : vector<16x8xf32>
    %19 = math.exp %18 : vector<16x8xf32>
    %cst_10 = arith.constant 1.000000e+00 : f32
    %20 = vector.broadcast %cst_10 : f32 to vector<16x8xf32>
    %21 = arith.addf %20, %19 : vector<16x8xf32>
    %22 = arith.divf %20, %21 : vector<16x8xf32>
    %c1 = arith.constant 1 : index
    %23 = memref.load %arg5[%c1] : memref<3xf32, #tpu.memory_space<smem>>
    %24 = vector.broadcast %23 : f32 to vector<16x8xf32>
    %25 = arith.mulf %22, %24 : vector<16x8xf32>
    %c2 = arith.constant 2 : index
    %26 = memref.load %arg5[%c2] : memref<3xf32, #tpu.memory_space<smem>>
    %27 = vector.broadcast %26 : f32 to vector<16x8xf32>
    %28 = arith.addf %25, %27 : vector<16x8xf32>
    %c0_11 = arith.constant 0 : index
    %c0_12 = arith.constant 0 : index
    %29 = vector.load %arg6[%c0_11, %c0_12] : memref<16x8xf32, #tpu.memory_space<vmem>>, vector<16x8xf32>
    tpu.vector_store %arg6[%c0_11, %c0_12], %28 {strides = array<i32>} : memref<16x8xf32, #tpu.memory_space<vmem>>, vector<16x8xf32>,
    return
  }
  func.func @transform_0(%arg0: i32) -> (i32, i32) {
    %c0_i32 = arith.constant 0 : i32
    %c0_i32_0 = arith.constant 0 : i32
    return %arg0, %c0_i32 : i32, i32
  }
  func.func @transform_1(%arg0: i32) -> (i32, i32) {
    %c0_i32 = arith.constant 0 : i32
    %c0_i32_0 = arith.constant 0 : i32
    %c0_i32_1 = arith.constant 0 : i32
    return %c0_i32, %c0_i32_0 : i32, i32
  }
  func.func @transform_2(%arg0: i32) -> (i32, i32) {
    %c0_i32 = arith.constant 0 : i32
    %c0_i32_0 = arith.constant 0 : i32
    %c0_i32_1 = arith.constant 0 : i32
    return %c0_i32, %c0_i32_0 : i32, i32
  }
  func.func @transform_3(%arg0: i32) -> (i32, i32) {
    %c0_i32 = arith.constant 0 : i32
    %c0_i32_0 = arith.constant 0 : i32
    %c0_i32_1 = arith.constant 0 : i32
    return %c0_i32, %c0_i32_0 : i32, i32
  }
  func.func @transform_4(%arg0: i32) -> i32 {
    %c0_i32 = arith.constant 0 : i32
    %c0_i32_0 = arith.constant 0 : i32
    return %c0_i32 : i32
  }
  func.func @transform_5(%arg0: i32) -> (i32, i32) {
    %c0_i32 = arith.constant 0 : i32
    %c0_i32_0 = arith.constant 0 : i32
    return %arg0, %c0_i32 : i32, i32
  }
}

</mosaic_0001>

<llo_original>
// kernel: nrf_forward.1
$region0: #{nrf_forward.1}
  #allocation0 [shape = 'u32[]', space=smem, size = 0x4, offset = 0x4, fixed_abs, tag = 'smem constant byte address 0x4 - core index']
  #allocation1 [shape = 'u32[72,128]{1,0:T(1,128)}', space=vmem, size = 0x9000, scoped, tag = 'internal scratch']
  %s0 = inlined_call_operand.vmem [shape: f32[32,256], index: 0, kind: input, shape index: {}]
  %s1 = inlined_call_operand.vmem [shape: bf16[256,256], index: 1, kind: input, shape index: {}]
  %s2 = inlined_call_operand.vmem [shape: f32[1,256], index: 2, kind: input, shape index: {}]
  %s3 = inlined_call_operand.vmem [shape: bf16[256,8], index: 3, kind: input, shape index: {}]
  %s4 = inlined_call_operand.vmem [shape: f32[3], index: 4, kind: input, shape index: {}]
  %s5 = inlined_call_operand.vmem [shape: f32[32,8], index: 5, kind: output, shape index: {}]
  %s6 = sld [smem:[#allocation0]]
  $region57: #{nrf_forward.1} parent=0
    _
  %s8 = ssub.s32 1, %s6
  %s9 = scalar_select 0, %s8, %s6
  $region1: #{nrf_forward.1} parent=0
    #allocation2 [shape = 'u8[512]{0}', space=smem, size = 0x200, scoped, tag = 'input window, operand 4, single buffered']
    #allocation3 [shape = 's32[2]{0}', space=sflag, size = 0x8, scoped, tag = 'scoped memory for nrf_forward.1']
    %10 = vsyncpa [#allocation3], 0
    loop: start=0, step=1, limit=4
    $region2: #{nrf_forward.1} parent=1 // loop_pre_header
      _
    $region3: #{nrf_forward.1} parent=1 // loop_header
      %s12 = sphi 0, %s16
      %p13 = scmp.ge.s32.totalorder %s12, 4
      %s22 = sphi 0, %s24
      %s25 = sphi 0, %s22
      %s26 = sphi 0, %s25
      %s42 = sphi 0, %s26
      %s46 = sphi 0, %s46
      %s48 = sphi 0, %s46
      %s49 = sphi 0, %s48
      %s63 = sphi 0, %s49
      %s67 = sphi 0, %s67
      %s69 = sphi 0, %s67
      %s70 = sphi 0, %s69
      %s84 = sphi 0, %s70
      %s88 = sphi 0, %s88
      %s90 = sphi 0, %s88
      %s91 = sphi 0, %s90
      %s105 = sphi 0, %s91
      %s109 = sphi 0, %s109
      %s111 = sphi 0, %s109
      %s112 = sphi 0, %s111
      %s126 = sphi 0, %s112
      %s132 = sphi 0, %s134
      %s135 = sphi 0, %s132
      %s136 = sphi 0, %s135
      %s152 = sphi 0, %s136
    $region4: #{nrf_forward.1} parent=1 // loop_header_branch
      %15 = sbr.rel (%p13) target = $region8
    $region5: #{nrf_forward.1} parent=1 // loop_body
      %s17 = ssub.s32 %s12, 1
      %s18 = ssub.s32 %s12, 2
      %s19 = sadd.s32 %s12, 1
      %s20 = ssub.s32 %s12, %s19
      %p21 = scmp.eq.s32.totalorder %s20, 0
      %s23 = sadd.s32 %s22, 1
      %s24 = scalar_select %p21, %s22, %s23
      %p27 = pneg %p21
      %p28 = scmp.eq.s32.totalorder %s12, 1
      %p29 = por %p27, %p28
      %p30 = scmp.ne.s32.totalorder %s22, %s25
      %p31 = scmp.eq.s32.totalorder %s12, 0
      %p32 = por %p30, %p31
      %p33 = scmp.ne.s32.totalorder %s22, %s25
      %p34 = scmp.eq.s32.totalorder %s17, 1
      %p35 = por %p33, %p34
      %p36 = scmp.ne.s32.totalorder %s25, %s26
      %p37 = scmp.eq.s32.totalorder %s17, 0
      %p38 = por %p36, %p37
      %p39 = scmp.ne.s32.totalorder %s25, %s26
      %p40 = scmp.eq.s32.totalorder %s18, 1
      %p41 = por %p39, %p40
      %p43 = scmp.ne.s32.totalorder %s26, %s42
      %p44 = scmp.eq.s32.totalorder %s18, 0
      %p45 = por %p43, %p44
      %s47 = sadd.s32 %s46, 1
      %p50 = scmp.eq.s32.totalorder %s12, 1
      %p51 = scmp.ne.s32.totalorder %s46, %s48
      %p52 = scmp.eq.s32.totalorder %s12, 0
      %p53 = por %p51, %p52
      %p54 = scmp.ne.s32.totalorder %s46, %s48
      %p55 = scmp.eq.s32.totalorder %s17, 1
      %p56 = por %p54, %p55
      %p57 = scmp.ne.s32.totalorder %s48, %s49
      %p58 = scmp.eq.s32.totalorder %s17, 0
      %p59 = por %p57, %p58
      %p60 = scmp.ne.s32.totalorder %s48, %s49
      %p61 = scmp.eq.s32.totalorder %s18, 1
      %p62 = por %p60, %p61
      %p64 = scmp.ne.s32.totalorder %s49, %s63
      %p65 = scmp.eq.s32.totalorder %s18, 0
      %p66 = por %p64, %p65
      %s68 = sadd.s32 %s67, 1
      %p71 = scmp.eq.s32.totalorder %s12, 1
      %p72 = scmp.ne.s32.totalorder %s67, %s69
      %p73 = scmp.eq.s32.totalorder %s12, 0
      %p74 = por %p72, %p73
      %p75 = scmp.ne.s32.totalorder %s67, %s69
      %p76 = scmp.eq.s32.totalorder %s17, 1
      %p77 = por %p75, %p76
      %p78 = scmp.ne.s32.totalorder %s69, %s70
      %p79 = scmp.eq.s32.totalorder %s17, 0
      %p80 = por %p78, %p79
      %p81 = scmp.ne.s32.totalorder %s69, %s70
      %p82 = scmp.eq.s32.totalorder %s18, 1
      %p83 = por %p81, %p82
      %p85 = scmp.ne.s32.totalorder %s70, %s84
      %p86 = scmp.eq.s32.totalorder %s18, 0
      %p87 = por %p85, %p86
      %s89 = sadd.s32 %s88, 1
      %p92 = scmp.eq.s32.totalorder %s12, 1
      %p93 = scmp.ne.s32.totalorder %s88, %s90
      %p94 = scmp.eq.s32.totalorder %s12, 0
      %p95 = por %p93, %p94
      %p96 = scmp.ne.s32.totalorder %s88, %s90
      %p97 = scmp.eq.s32.totalorder %s17, 1
      %p98 = por %p96, %p97
      %p99 = scmp.ne.s32.totalorder %s90, %s91
      %p100 = scmp.eq.s32.totalorder %s17, 0
      %p101 = por %p99, %p100
      %p102 = scmp.ne.s32.totalorder %s90, %s91
      %p103 = scmp.eq.s32.totalorder %s18, 1
      %p104 = por %p102, %p103
      %p106 = scmp.ne.s32.totalorder %s91, %s105
      %p107 = scmp.eq.s32.totalorder %s18, 0
      %p108 = por %p106, %p107
      %s110 = sadd.s32 %s109, 1
      %p113 = scmp.eq.s32.totalorder %s12, 1
      %p114 = scmp.ne.s32.totalorder %s109, %s111
      %p115 = scmp.eq.s32.totalorder %s12, 0
      %p116 = por %p114, %p115
      %p117 = scmp.ne.s32.totalorder %s109, %s111
      %p118 = scmp.eq.s32.totalorder %s17, 1
      %p119 = por %p117, %p118
      %p120 = scmp.ne.s32.totalorder %s111, %s112
      %p121 = scmp.eq.s32.totalorder %s17, 0
      %p122 = por %p120, %p121
      %p123 = scmp.ne.s32.totalorder %s111, %s112
      %p124 = scmp.eq.s32.totalorder %s18, 1
      %p125 = por %p123, %p124
      %p127 = scmp.ne.s32.totalorder %s112, %s126
      %p128 = scmp.eq.s32.totalorder %s18, 0
      %p129 = por %p127, %p128
      %s130 = ssub.s32 %s12, %s19
      %p131 = scmp.eq.s32.totalorder %s130, 0
      %s133 = sadd.s32 %s132, 1
      %s134 = scalar_select %p131, %s132, %s133
      %p137 = pneg %p131
      %p138 = scmp.eq.s32.totalorder %s12, 1
      %p139 = por %p137, %p138
      %p140 = scmp.ne.s32.totalorder %s132, %s135
      %p141 = scmp.eq.s32.totalorder %s12, 0
      %p142 = por %p140, %p141
      %p143 = scmp.ne.s32.totalorder %s132, %s135
      %p144 = scmp.eq.s32.totalorder %s17, 1
      %p145 = por %p143, %p144
      %p146 = scmp.ne.s32.totalorder %s135, %s136
      %p147 = scmp.eq.s32.totalorder %s17, 0
      %p148 = por %p146, %p147
      %p149 = scmp.ne.s32.totalorder %s135, %s136
      %p150 = scmp.eq.s32.totalorder %s18, 1
      %p151 = por %p149, %p150
      %p153 = scmp.ne.s32.totalorder %s136, %s152
      %p154 = scmp.eq.s32.totalorder %s18, 0
      %p155 = por %p153, %p154
      %p156 = scmp.le.s32.totalorder 1, %s12
      %p157 = scmp.lt.s32.totalorder %s12, 3
      %p158 = pnand %p156, %p157
      %p159 = pneg %p158
      // Predicated region
      $region9: #{nrf_forward.1} parent=5 // pred_check
        _
      $region10: #{nrf_forward.1} parent=5 // pred_check_branch
        %161 = sbr.rel (%p158) target = $region12
      $region11: #{nrf_forward.1} parent=5 // pred_region
        %s162 = ssub.s32 %s12, 1
        // Predicated region
        $region13: #{nrf_forward.1} parent=11 // pred_check
          %p163 = pneg %p59
        $region14: #{nrf_forward.1} parent=11 // pred_check_branch
          %165 = sbr.rel (%p163) target = $region16
        $region15: #{nrf_forward.1} parent=11 // pred_region
          _
        $region16: #{nrf_forward.1} parent=11 // pred_fallthru
          _
        // Predicated region
        $region17: #{nrf_forward.1} parent=11 // pred_check
          %p166 = pneg %p80
        $region18: #{nrf_forward.1} parent=11 // pred_check_branch
          %168 = sbr.rel (%p166) target = $region20
        $region19: #{nrf_forward.1} parent=11 // pred_region
          _
        $region20: #{nrf_forward.1} parent=11 // pred_fallthru
          _
        // Predicated region
        $region21: #{nrf_forward.1} parent=11 // pred_check
          %p169 = pneg %p101
        $region22: #{nrf_forward.1} parent=11 // pred_check_branch
          %171 = sbr.rel (%p169) target = $region24
        $region23: #{nrf_forward.1} parent=11 // pred_region
          _
        $region24: #{nrf_forward.1} parent=11 // pred_fallthru
          _
        // Predicated region
        $region25: #{nrf_forward.1} parent=11 // pred_check
          %p172 = pneg %p122
        $region26: #{nrf_forward.1} parent=11 // pred_check_branch
          %174 = sbr.rel (%p172) target = $region28
        $region27: #{nrf_forward.1} parent=11 // pred_region
          %176 = vsyncadd [#allocation3], 0
          %s178 = sshll.u32 %s4, 4
          %s179 = int_to_ptr.vmem [resolvable:$true] %s178
          %181 = dma.vmem_to_smem %s179, 16, [#allocation2], [#allocation3]
        $region28: #{nrf_forward.1} parent=11 // pred_fallthru
          _
      $region12: #{nrf_forward.1} parent=5 // pred_fallthru
        _
      %p182 = scmp.lt.s32.totalorder %s12, 2
      // Predicated region
      $region29: #{nrf_forward.1} parent=5 // pred_check
        %p183 = pneg %p182
      $region30: #{nrf_forward.1} parent=5 // pred_check_branch
        %185 = sbr.rel (%p183) target = $region32
      $region31: #{nrf_forward.1} parent=5 // pred_region
        // Predicated region
        $region33: #{nrf_forward.1} parent=31 // pred_check
          %p186 = pneg %p32
        $region34: #{nrf_forward.1} parent=31 // pred_check_branch
          %188 = sbr.rel (%p186) target = $region36
        $region35: #{nrf_forward.1} parent=31 // pred_region
          %s189 = smul.u32 2, %s12
          %p190 = scmp.lt.s32.totalorder %s189, 3
          %s191 = scalar_select %p190, %s189, 3
          %s192 = smul.addr %s191, 2
          %s193 = smul.addr %s192, 8
          %s194 = scalar_lea.vmem %s0, %s193
          %s195 = smul.u32 2, %s12
        $region36: #{nrf_forward.1} parent=31 // pred_fallthru
          _
      $region32: #{nrf_forward.1} parent=5 // pred_fallthru
        _
      %p196 = scmp.le.s32.totalorder 1, %s12
      %p197 = scmp.lt.s32.totalorder %s12, 3
      %p198 = pnand %p196, %p197
      %p199 = pneg %p198
      // Predicated region
      $region37: #{nrf_forward.1} parent=5 // pred_check
        _
      $region38: #{nrf_forward.1} parent=5 // pred_check_branch
        %201 = sbr.rel (%p198) target = $region40
      $region39: #{nrf_forward.1} parent=5 // pred_region
        %s202 = ssub.s32 %s12, 1
        // Predicated region
        $region41: #{nrf_forward.1} parent=39 // pred_check
          %p203 = pneg %p122
        $region42: #{nrf_forward.1} parent=39 // pred_check_branch
          %205 = sbr.rel (%p203) target = $region44
        $region43: #{nrf_forward.1} parent=39 // pred_region
          %207 = dma.done [#allocation3], 16
        $region44: #{nrf_forward.1} parent=39 // pred_fallthru
          _
        %208 = sfence
        %s209 = smul.u32 2, %s17
        %p210 = scmp.lt.s32.totalorder %s209, 3
        %s211 = scalar_select %p210, %s209, 3
        %s212 = smul.addr %s211, 2
        %s213 = smul.addr %s212, 8
        %s214 = scalar_lea.vmem %s0, %s213
        %p215 = pneg %p38
        %p216 = pneg %p35
        %p217 = pneg %p59
        %p218 = pneg %p56
        %p219 = pneg %p80
        %p220 = pneg %p77
        %p221 = pneg %p101
        %p222 = pneg %p98
        %p223 = pneg %p122
        %p224 = pneg %p119
        %p225 = pneg %p148
        %p226 = pneg %p145
        %s227 = smul.u32 2, %s17
        %p228 = scmp.lt.s32.totalorder %s227, 3
        %s229 = scalar_select %p228, %s227, 3
        %s230 = smul.addr %s229, 8
        %s231 = scalar_lea.vmem %s5, %s230
        %s232 = smul.u32 2, %s17
        %p233 = scmp.lt.s32.totalorder %s232, 3
        %s234 = scalar_select %p233, %s232, 3
        %s235 = smul.addr %s234, 2
        %s236 = smul.addr %s235, 8
        %s237 = scalar_lea.vmem %s0, %s236
        %s238 = smul.u32 2, %s17
        %s239 = smul.u32 2, %s17
        %p240 = scmp.lt.s32.totalorder %s239, 3
        %s241 = scalar_select %p240, %s239, 3
        %s242 = smul.addr %s241, 8
        %s243 = scalar_lea.vmem %s5, %s242
        %s244 = smul.u32 2, %s17
        %v245 = vld [vmem:[%s237] sm:$0xff]
        %v246 = vld [vmem:[%s237 + $0x8] sm:$0xff]
        %v247 = vld [vmem:[%s237 + $0x10] sm:$0xff]
        %v248 = vld [vmem:[%s237 + $0x18] sm:$0xff]
        %v249 = vpack.c.bf16 %v247, %v245
        %v250 = vpack.c.bf16 %v248, %v246
        %v251 = vld [vmem:[%s1] sm:$0xff]
        %v252 = vld [vmem:[%s1 + $0x8] sm:$0xff]
        %v253 = vld [vmem:[%s1 + $0x10] sm:$0xff]
        %v254 = vld [vmem:[%s1 + $0x18] sm:$0xff]
        %v255 = vld [vmem:[%s1 + $0x20] sm:$0xff]
        %v256 = vld [vmem:[%s1 + $0x28] sm:$0xff]
        %v257 = vld [vmem:[%s1 + $0x30] sm:$0xff]
        %v258 = vld [vmem:[%s1 + $0x38] sm:$0xff]
        %v259 = vld [vmem:[%s1 + $0x40] sm:$0xff]
        %v260 = vld [vmem:[%s1 + $0x48] sm:$0xff]
        %v261 = vld [vmem:[%s1 + $0x50] sm:$0xff]
        %v262 = vld [vmem:[%s1 + $0x58] sm:$0xff]
        %v263 = vld [vmem:[%s1 + $0x60] sm:$0xff]
        %v264 = vld [vmem:[%s1 + $0x68] sm:$0xff]
        %v265 = vld [vmem:[%s1 + $0x70] sm:$0xff]
        %v266 = vld [vmem:[%s1 + $0x78] sm:$0xff]
        %v267 = vld [vmem:[%s1 + $0x80] sm:$0xff]
        %v268 = vld [vmem:[%s1 + $0x88] sm:$0xff]
        %v269 = vld [vmem:[%s1 + $0x90] sm:$0xff]
        %v270 = vld [vmem:[%s1 + $0x98] sm:$0xff]
        %v271 = vld [vmem:[%s1 + $0xa0] sm:$0xff]
        %v272 = vld [vmem:[%s1 + $0xa8] sm:$0xff]
        %v273 = vld [vmem:[%s1 + $0xb0] sm:$0xff]
        %v274 = vld [vmem:[%s1 + $0xb8] sm:$0xff]
        %v275 = vld [vmem:[%s1 + $0xc0] sm:$0xff]
        %v276 = vld [vmem:[%s1 + $0xc8] sm:$0xff]
        %v277 = vld [vmem:[%s1 + $0xd0] sm:$0xff]
        %v278 = vld [vmem:[%s1 + $0xd8] sm:$0xff]
        %v279 = vld [vmem:[%s1 + $0xe0] sm:$0xff]
        %v280 = vld [vmem:[%s1 + $0xe8] sm:$0xff]
        %v281 = vld [vmem:[%s1 + $0xf0] sm:$0xff]
        %v282 = vld [vmem:[%s1 + $0xf8] sm:$0xff]
        %v283 = vld [vmem:[%s2] sm:$0x3]
        %v285 = vperm.slane %v283, 0
        %v286 = vperm.slane %v283, 1
        %v321 = vunpack.c.l.b16 %v251
        %v322 = vunpack.c.h.b16 %v251
        %v323 = vunpack.c.l.b16 %v252
        %v324 = vunpack.c.h.b16 %v252
        %v325 = vunpack.c.l.b16 %v253
        %v326 = vunpack.c.h.b16 %v253
        %v327 = vunpack.c.l.b16 %v254
        %v328 = vunpack.c.h.b16 %v254
        %v329 = vunpack.c.l.b16 %v255
        %v330 = vunpack.c.h.b16 %v255
        %v331 = vunpack.c.l.b16 %v256
        %v332 = vunpack.c.h.b16 %v256
        %v333 = vunpack.c.l.b16 %v257
        %v334 = vunpack.c.h.b16 %v257
        %v335 = vunpack.c.l.b16 %v258
        %v336 = vunpack.c.h.b16 %v258
        %v337 = vunpack.c.l.b16 %v259
        %v338 = vunpack.c.h.b16 %v259
        %v339 = vunpack.c.l.b16 %v260
        %v340 = vunpack.c.h.b16 %v260
        %v341 = vunpack.c.l.b16 %v261
        %v342 = vunpack.c.h.b16 %v261
        %v343 = vunpack.c.l.b16 %v262
        %v344 = vunpack.c.h.b16 %v262
        %v345 = vunpack.c.l.b16 %v263
        %v346 = vunpack.c.h.b16 %v263
        %v347 = vunpack.c.l.b16 %v264
        %v348 = vunpack.c.h.b16 %v264
        %v349 = vunpack.c.l.b16 %v265
        %v350 = vunpack.c.h.b16 %v265
        %v351 = vunpack.c.l.b16 %v266
        %v352 = vunpack.c.h.b16 %v266
        %v353 = vunpack.c.l.b16 %v267
        %v354 = vunpack.c.h.b16 %v267
        %v355 = vunpack.c.l.b16 %v268
        %v356 = vunpack.c.h.b16 %v268
        %v357 = vunpack.c.l.b16 %v269
        %v358 = vunpack.c.h.b16 %v269
        %v359 = vunpack.c.l.b16 %v270
        %v360 = vunpack.c.h.b16 %v270
        %v361 = vunpack.c.l.b16 %v271
        %v362 = vunpack.c.h.b16 %v271
        %v363 = vunpack.c.l.b16 %v272
        %v364 = vunpack.c.h.b16 %v272
        %v365 = vunpack.c.l.b16 %v273
        %v366 = vunpack.c.h.b16 %v273
        %v367 = vunpack.c.l.b16 %v274
        %v368 = vunpack.c.h.b16 %v274
        %v369 = vunpack.c.l.b16 %v275
        %v370 = vunpack.c.h.b16 %v275
        %v371 = vunpack.c.l.b16 %v276
        %v372 = vunpack.c.h.b16 %v276
        %v373 = vunpack.c.l.b16 %v277
        %v374 = vunpack.c.h.b16 %v277
        %v375 = vunpack.c.l.b16 %v278
        %v376 = vunpack.c.h.b16 %v278
        %v377 = vunpack.c.l.b16 %v279
        %v378 = vunpack.c.h.b16 %v279
        %v379 = vunpack.c.l.b16 %v280
        %v380 = vunpack.c.h.b16 %v280
        %v381 = vunpack.c.l.b16 %v281
        %v382 = vunpack.c.h.b16 %v281
        %v383 = vunpack.c.l.b16 %v282
        %v384 = vunpack.c.h.b16 %v282
        %v385 = vpack.c.b16 %v323, %v321
        %v386 = vpack.c.b16 %v324, %v322
        %v387 = vpack.c.b16 %v327, %v325
        %v388 = vpack.c.b16 %v328, %v326
        %v389 = vpack.c.b16 %v331, %v329
        %v390 = vpack.c.b16 %v332, %v330
        %v391 = vpack.c.b16 %v335, %v333
        %v392 = vpack.c.b16 %v336, %v334
        %v393 = vpack.c.b16 %v339, %v337
        %v394 = vpack.c.b16 %v340, %v338
        %v395 = vpack.c.b16 %v343, %v341
        %v396 = vpack.c.b16 %v344, %v342
        %v397 = vpack.c.b16 %v347, %v345
        %v398 = vpack.c.b16 %v348, %v346
        %v399 = vpack.c.b16 %v351, %v349
        %v400 = vpack.c.b16 %v352, %v350
        %v401 = vpack.c.b16 %v355, %v353
        %v402 = vpack.c.b16 %v356, %v354
        %v403 = vpack.c.b16 %v359, %v357
        %v404 = vpack.c.b16 %v360, %v358
        %v405 = vpack.c.b16 %v363, %v361
        %v406 = vpack.c.b16 %v364, %v362
        %v407 = vpack.c.b16 %v367, %v365
        %v408 = vpack.c.b16 %v368, %v366
        %v409 = vpack.c.b16 %v371, %v369
        %v410 = vpack.c.b16 %v372, %v370
        %v411 = vpack.c.b16 %v375, %v373
        %v412 = vpack.c.b16 %v376, %v374
        %v413 = vpack.c.b16 %v379, %v377
        %v414 = vpack.c.b16 %v380, %v378
        %v415 = vpack.c.b16 %v383, %v381
        %v416 = vpack.c.b16 %v384, %v382
        %449 = vmatpush.bf16.msra.mxu0 %v399
        %450 = vmatpush.bf16.msra.mxu0 %v397
        %451 = vmatpush.bf16.msra.mxu0 %v395
        %452 = vmatpush.bf16.msra.mxu0 %v393
        %453 = vmatpush.bf16.msra.mxu0 %v391
        %454 = vmatpush.bf16.msra.mxu0 %v389
        %455 = vmatpush.bf16.msra.mxu0 %v387
        %456 = vmatpush.bf16.msra.mxu0 %v385
        %457 = vmatmul.bf16.gmra.mxu0 %v249
        %v458 = vpop.f32.mrf.mxu0
        %v459 = vadd.f32 %v285, %v458
        %v460 = vpop.f32.mrf.mxu0
        %v461 = vadd.f32 %v285, %v460
        %462 = vdwg.mxu0
        %463 = vmatpush.bf16.msra.mxu0 %v415
        %464 = vmatpush.bf16.msra.mxu0 %v413
        %465 = vmatpush.bf16.msra.mxu0 %v411
        %466 = vmatpush.bf16.msra.mxu0 %v409
        %467 = vmatpush.bf16.msra.mxu0 %v407
        %468 = vmatpush.bf16.msra.mxu0 %v405
        %469 = vmatpush.bf16.msra.mxu0 %v403
        %470 = vmatpush.bf16.msra.mxu0 %v401
        %471 = vmatmul.bf16.gmra.mxu0 %v250
        %v472 = vpop.f32.mrf.mxu0
        %v473 = vadd.f32 %v459, %v472
        %v474 = vpop.f32.mrf.mxu0
        %v475 = vadd.f32 %v461, %v474
        %476 = vdwg.mxu0
        %477 = vmatpush.bf16.msra.mxu0 %v400
        %478 = vmatpush.bf16.msra.mxu0 %v398
        %479 = vmatpush.bf16.msra.mxu0 %v396
        %480 = vmatpush.bf16.msra.mxu0 %v394
        %481 = vmatpush.bf16.msra.mxu0 %v392
        %482 = vmatpush.bf16.msra.mxu0 %v390
        %483 = vmatpush.bf16.msra.mxu0 %v388
        %484 = vmatpush.bf16.msra.mxu0 %v386
        %485 = vmatmul.bf16.gmra.mxu0 %v249
        %v486 = vpop.f32.mrf.mxu0
        %v487 = vadd.f32 %v286, %v486
        %v488 = vpop.f32.mrf.mxu0
        %v489 = vadd.f32 %v286, %v488
        %490 = vdwg.mxu0
        %491 = vmatpush.bf16.msra.mxu0 %v416
        %492 = vmatpush.bf16.msra.mxu0 %v414
        %493 = vmatpush.bf16.msra.mxu0 %v412
        %494 = vmatpush.bf16.msra.mxu0 %v410
        %495 = vmatpush.bf16.msra.mxu0 %v408
        %496 = vmatpush.bf16.msra.mxu0 %v406
        %497 = vmatpush.bf16.msra.mxu0 %v404
        %498 = vmatpush.bf16.msra.mxu0 %v402
        %499 = vmatmul.bf16.gmra.mxu0 %v250
        %v500 = vpop.f32.mrf.mxu0
        %v501 = vadd.f32 %v487, %v500
        %v502 = vpop.f32.mrf.mxu0
        %v503 = vadd.f32 %v489, %v502
        %504 = vdwg.mxu0
        %v505 = vxor.u32 %v473, 2147483648
        %v506 = vxor.u32 %v501, 2147483648
        %v507 = vxor.u32 %v475, 2147483648
        %v508 = vxor.u32 %v503, 2147483648
        %v509 = vmul.f32 %v505, 1.442695
        %v510 = vpow.pop %v509
        %v511 = vmul.f32 %v506, 1.442695
        %v512 = vpow.pop %v511
        %v513 = vmul.f32 %v507, 1.442695
        %v514 = vpow.pop %v513
        %v515 = vmul.f32 %v508, 1.442695
        %v516 = vpow.pop %v515
        %v517 = vadd.f32 %v510, 1.0
        %v518 = vadd.f32 %v512, 1.0
        %v519 = vadd.f32 %v514, 1.0
        %v520 = vadd.f32 %v516, 1.0
        %v521 = vrcp.pop %v517
        %v522 = vmul.f32 %v517, %v521
        %v523 = vsub.f32 1.0, %v522
        %v524 = vmul.f32 %v521, %v523
        %v525 = vadd.f32 %v521, %v524
        %vm526 = vweird.f32 %v517
        %vm527 = vweird.f32 %v521
        %vm528 = vmor %vm526, %vm527
        %v529 = vsel %vm528, %v521, %v525
        %v530 = vand.u32 2147483647, %v517
        %vm531 = vcmp.eq.f32.partialorder %v530, 8.507059e+37
        %v532 = vand.u32 %v517, 2147483648
        %v533 = vor.u32 1.1754944e-38, %v532
        %v534 = vsel %vm531, %v533, %v529
        %v535 = vmul.f32 1.0, %v534
        %v536 = vrcp.pop %v518
        %v537 = vmul.f32 %v518, %v536
        %v538 = vsub.f32 1.0, %v537
        %v539 = vmul.f32 %v536, %v538
        %v540 = vadd.f32 %v536, %v539
        %vm541 = vweird.f32 %v518
        %vm542 = vweird.f32 %v536
        %vm543 = vmor %vm541, %vm542
        %v544 = vsel %vm543, %v536, %v540
        %v545 = vand.u32 2147483647, %v518
        %vm546 = vcmp.eq.f32.partialorder %v545, 8.507059e+37
        %v547 = vand.u32 %v518, 2147483648
        %v548 = vor.u32 1.1754944e-38, %v547
        %v549 = vsel %vm546, %v548, %v544
        %v550 = vmul.f32 1.0, %v549
        %v551 = vrcp.pop %v519
        %v552 = vmul.f32 %v519, %v551
        %v553 = vsub.f32 1.0, %v552
        %v554 = vmul.f32 %v551, %v553
        %v555 = vadd.f32 %v551, %v554
        %vm556 = vweird.f32 %v519
        %vm557 = vweird.f32 %v551
        %vm558 = vmor %vm556, %vm557
        %v559 = vsel %vm558, %v551, %v555
        %v560 = vand.u32 2147483647, %v519
        %vm561 = vcmp.eq.f32.partialorder %v560, 8.507059e+37
        %v562 = vand.u32 %v519, 2147483648
        %v563 = vor.u32 1.1754944e-38, %v562
        %v564 = vsel %vm561, %v563, %v559
        %v565 = vmul.f32 1.0, %v564
        %v566 = vrcp.pop %v520
        %v567 = vmul.f32 %v520, %v566
        %v568 = vsub.f32 1.0, %v567
        %v569 = vmul.f32 %v566, %v568
        %v570 = vadd.f32 %v566, %v569
        %vm571 = vweird.f32 %v520
        %vm572 = vweird.f32 %v566
        %vm573 = vmor %vm571, %vm572
        %v574 = vsel %vm573, %v566, %v570
        %v575 = vand.u32 2147483647, %v520
        %vm576 = vcmp.eq.f32.partialorder %v575, 8.507059e+37
        %v577 = vand.u32 %v520, 2147483648
        %v578 = vor.u32 1.1754944e-38, %v577
        %v579 = vsel %vm576, %v578, %v574
        %v580 = vmul.f32 1.0, %v579
        %v581 = vpack.c.bf16 %v565, %v535
        %v582 = vpack.c.bf16 %v580, %v550
        %v583 = vld [vmem:[%s3] sm:$0xf]
        %v584 = vld [vmem:[%s3 + $0x4] sm:$0xf]
        %v585 = vld [vmem:[%s3 + $0x8] sm:$0xf]
        %v586 = vld [vmem:[%s3 + $0xc] sm:$0xf]
        %v587 = vld [vmem:[%s3 + $0x10] sm:$0xf]
        %v588 = vld [vmem:[%s3 + $0x14] sm:$0xf]
        %v589 = vld [vmem:[%s3 + $0x18] sm:$0xf]
        %v590 = vld [vmem:[%s3 + $0x1c] sm:$0xf]
        %v591 = vld [vmem:[%s3 + $0x20] sm:$0xf]
        %v592 = vld [vmem:[%s3 + $0x24] sm:$0xf]
        %v593 = vld [vmem:[%s3 + $0x28] sm:$0xf]
        %v594 = vld [vmem:[%s3 + $0x2c] sm:$0xf]
        %v595 = vld [vmem:[%s3 + $0x30] sm:$0xf]
        %v596 = vld [vmem:[%s3 + $0x34] sm:$0xf]
        %v597 = vld [vmem:[%s3 + $0x38] sm:$0xf]
        %v598 = vld [vmem:[%s3 + $0x3c] sm:$0xf]
        %v599 = vld [vmem:[%s3 + $0x40] sm:$0xf]
        %v600 = vld [vmem:[%s3 + $0x44] sm:$0xf]
        %v601 = vld [vmem:[%s3 + $0x48] sm:$0xf]
        %v602 = vld [vmem:[%s3 + $0x4c] sm:$0xf]
        %v603 = vld [vmem:[%s3 + $0x50] sm:$0xf]
        %v604 = vld [vmem:[%s3 + $0x54] sm:$0xf]
        %v605 = vld [vmem:[%s3 + $0x58] sm:$0xf]
        %v606 = vld [vmem:[%s3 + $0x5c] sm:$0xf]
        %v607 = vld [vmem:[%s3 + $0x60] sm:$0xf]
        %v608 = vld [vmem:[%s3 + $0x64] sm:$0xf]
        %v609 = vld [vmem:[%s3 + $0x68] sm:$0xf]
        %v610 = vld [vmem:[%s3 + $0x6c] sm:$0xf]
        %v611 = vld [vmem:[%s3 + $0x70] sm:$0xf]
        %v612 = vld [vmem:[%s3 + $0x74] sm:$0xf]
        %v613 = vld [vmem:[%s3 + $0x78] sm:$0xf]
        %v614 = vld [vmem:[%s3 + $0x7c] sm:$0xf]
        %s615 = sld [smem:[#allocation2]]
        %v616 = vstv %s615
        %v649 = vunpack.c.l.b16 %v583
        %v650 = vunpack.c.l.b16 %v584
        %v651 = vunpack.c.l.b16 %v585
        %v652 = vunpack.c.l.b16 %v586
        %v653 = vunpack.c.l.b16 %v587
        %v654 = vunpack.c.l.b16 %v588
        %v655 = vunpack.c.l.b16 %v589
        %v656 = vunpack.c.l.b16 %v590
        %v657 = vunpack.c.l.b16 %v591
        %v658 = vunpack.c.l.b16 %v592
        %v659 = vunpack.c.l.b16 %v593
        %v660 = vunpack.c.l.b16 %v594
        %v661 = vunpack.c.l.b16 %v595
        %v662 = vunpack.c.l.b16 %v596
        %v663 = vunpack.c.l.b16 %v597
        %v664 = vunpack.c.l.b16 %v598
        %v665 = vunpack.c.l.b16 %v599
        %v666 = vunpack.c.l.b16 %v600
        %v667 = vunpack.c.l.b16 %v601
        %v668 = vunpack.c.l.b16 %v602
        %v669 = vunpack.c.l.b16 %v603
        %v670 = vunpack.c.l.b16 %v604
        %v671 = vunpack.c.l.b16 %v605
        %v672 = vunpack.c.l.b16 %v606
        %v673 = vunpack.c.l.b16 %v607
        %v674 = vunpack.c.l.b16 %v608
        %v675 = vunpack.c.l.b16 %v609
        %v676 = vunpack.c.l.b16 %v610
        %v677 = vunpack.c.l.b16 %v611
        %v678 = vunpack.c.l.b16 %v612
        %v679 = vunpack.c.l.b16 %v613
        %v680 = vunpack.c.l.b16 %v614
        %v681 = vpack.c.b16 %v650, %v649
        %v682 = vpack.c.b16 %v652, %v651
        %v683 = vpack.c.b16 %v654, %v653
        %v684 = vpack.c.b16 %v656, %v655
        %v685 = vpack.c.b16 %v658, %v657
        %v686 = vpack.c.b16 %v660, %v659
        %v687 = vpack.c.b16 %v662, %v661
        %v688 = vpack.c.b16 %v664, %v663
        %v689 = vpack.c.b16 %v666, %v665
        %v690 = vpack.c.b16 %v668, %v667
        %v691 = vpack.c.b16 %v670, %v669
        %v692 = vpack.c.b16 %v672, %v671
        %v693 = vpack.c.b16 %v674, %v673
        %v694 = vpack.c.b16 %v676, %v675
        %v695 = vpack.c.b16 %v678, %v677
        %v696 = vpack.c.b16 %v680, %v679
        %713 = vmatpush.bf16.msra.mxu0 %v688
        %714 = vmatpush.bf16.msra.mxu0 %v687
        %715 = vmatpush.bf16.msra.mxu0 %v686
        %716 = vmatpush.bf16.msra.mxu0 %v685
        %717 = vmatpush.bf16.msra.mxu0 %v684
        %718 = vmatpush.bf16.msra.mxu0 %v683
        %719 = vmatpush.bf16.msra.mxu0 %v682
        %720 = vmatpush.bf16.msra.mxu0 %v681
        %721 = vmatmul.bf16.gmra.mxu0 %v581
        %v722 = vpop.f32.mrf.mxu0
        %v723 = vadd.f32 %v616, %v722
        %v724 = vpop.f32.mrf.mxu0
        %v725 = vadd.f32 %v616, %v724
        %726 = vdwg.mxu0
        %727 = vmatpush.bf16.msra.mxu0 %v696
        %728 = vmatpush.bf16.msra.mxu0 %v695
        %729 = vmatpush.bf16.msra.mxu0 %v694
        %730 = vmatpush.bf16.msra.mxu0 %v693
        %731 = vmatpush.bf16.msra.mxu0 %v692
        %732 = vmatpush.bf16.msra.mxu0 %v691
        %733 = vmatpush.bf16.msra.mxu0 %v690
        %734 = vmatpush.bf16.msra.mxu0 %v689
        %735 = vmatmul.bf16.gmra.mxu0 %v582
        %v736 = vpop.f32.mrf.mxu0
        %v737 = vadd.f32 %v723, %v736
        %v738 = vpop.f32.mrf.mxu0
        %v739 = vadd.f32 %v725, %v738
        %740 = vdwg.mxu0
        %v741 = vxor.u32 %v737, 2147483648
        %v742 = vxor.u32 %v739, 2147483648
        %v743 = vmul.f32 %v741, 1.442695
        %v744 = vpow.pop %v743
        %v745 = vmul.f32 %v742, 1.442695
        %v746 = vpow.pop %v745
        %v747 = vadd.f32 %v744, 1.0
        %v748 = vadd.f32 %v746, 1.0
        %v749 = vrcp.pop %v747
        %v750 = vmul.f32 %v747, %v749
        %v751 = vsub.f32 1.0, %v750
        %v752 = vmul.f32 %v749, %v751
        %v753 = vadd.f32 %v749, %v752
        %vm754 = vweird.f32 %v747
        %vm755 = vweird.f32 %v749
        %vm756 = vmor %vm754, %vm755
        %v757 = vsel %vm756, %v749, %v753
        %v758 = vand.u32 2147483647, %v747
        %vm759 = vcmp.eq.f32.partialorder %v758, 8.507059e+37
        %v760 = vand.u32 %v747, 2147483648
        %v761 = vor.u32 1.1754944e-38, %v760
        %v762 = vsel %vm759, %v761, %v757
        %v763 = vmul.f32 1.0, %v762
        %v764 = vrcp.pop %v748
        %v765 = vmul.f32 %v748, %v764
        %v766 = vsub.f32 1.0, %v765
        %v767 = vmul.f32 %v764, %v766
        %v768 = vadd.f32 %v764, %v767
        %vm769 = vweird.f32 %v748
        %vm770 = vweird.f32 %v764
        %vm771 = vmor %vm769, %vm770
        %v772 = vsel %vm771, %v764, %v768
        %v773 = vand.u32 2147483647, %v748
        %vm774 = vcmp.eq.f32.partialorder %v773, 8.507059e+37
        %v775 = vand.u32 %v748, 2147483648
        %v776 = vor.u32 1.1754944e-38, %v775
        %v777 = vsel %vm774, %v776, %v772
        %v778 = vmul.f32 1.0, %v777
        %s779 = sld [smem:[#allocation2 + $0x1]]
        %v780 = vstv %s779
        %v781 = vmul.f32 %v763, %v780
        %v782 = vmul.f32 %v778, %v780
        %s783 = sld [smem:[#allocation2 + $0x2]]
        %v784 = vstv %s783
        %v785 = vadd.f32 %v781, %v784
        %v786 = vadd.f32 %v782, %v784
        %vm787 = vcmask 64512
        %788 = vst.msk [vmem:[%s243] sm:$0xff] %vm787, %v785
        %789 = vst.msk [vmem:[%s243 + $0x8] sm:$0xff] %vm787, %v786
        %s790 = smul.u32 2, %s17
        %p791 = scmp.lt.s32.totalorder %s790, 3
        %s792 = scalar_select %p791, %s790, 3
        %s793 = smul.addr %s792, 8
        %s794 = scalar_lea.vmem %s5, %s793
        // Predicated region
        $region45: #{nrf_forward.1} parent=39 // pred_check
          %p795 = pneg %p145
        $region46: #{nrf_forward.1} parent=39 // pred_check_branch
          %797 = sbr.rel (%p795) target = $region48
        $region47: #{nrf_forward.1} parent=39 // pred_region
          %s798 = smul.u32 2, %s17
        $region48: #{nrf_forward.1} parent=39 // pred_fallthru
          _
      $region40: #{nrf_forward.1} parent=5 // pred_fallthru
        _
      %p799 = scmp.le.s32.totalorder 2, %s12
      // Predicated region
      $region49: #{nrf_forward.1} parent=5 // pred_check
        %p800 = pneg %p799
      $region50: #{nrf_forward.1} parent=5 // pred_check_branch
        %802 = sbr.rel (%p800) target = $region52
      $region51: #{nrf_forward.1} parent=5 // pred_region
        %s803 = ssub.s32 %s12, 2
        // Predicated region
        $region53: #{nrf_forward.1} parent=51 // pred_check
          %p804 = pneg %p151
        $region54: #{nrf_forward.1} parent=51 // pred_check_branch
          %806 = sbr.rel (%p804) target = $region56
        $region55: #{nrf_forward.1} parent=51 // pred_region
          %s807 = smul.u32 2, %s18
          %p808 = scmp.lt.s32.totalorder %s807, 3
          %s809 = scalar_select %p808, %s807, 3
          %s810 = smul.addr %s809, 8
          %s811 = scalar_lea.vmem %s5, %s810
        $region56: #{nrf_forward.1} parent=51 // pred_fallthru
          _
      $region52: #{nrf_forward.1} parent=5 // pred_fallthru
        _
    $region6: #{nrf_forward.1} parent=1 // loop_footer
      %s16 = sadd.s32 1, %s12
    $region7: #{nrf_forward.1} parent=1 // loop_footer_branch
      %11 = sbr.rel target = $region3
    $region8: #{nrf_forward.1} parent=1 // loop_exit
      _
    %812 = vsyncpa [#allocation3], 1
    %s813 = scalar_lea.sflag [#allocation3], 1
    %814 = vsyncpa %s813, 1

</llo_original>
